<compile_context>
chip_gen: v5e
topology: v5e:2x2
jax: 0.10.0
libtpu: 0.0.40
codegen_flags: <defaults>
</compile_context>

<pallas_src>
import functools

import jax
import jax.numpy as jnp
from jax.experimental import pallas as pl
from jax.experimental.pallas import tpu as pltpu


def _round_up(x, m):
    return ((x + m - 1) // m) * m


def _action_encoder_kernel(x_ref, w1_ref, b1_ref, w2_ref, b2_ref,
                           w3_ref, b3_ref, o_ref):
    # x_ref / w*_ref are bf16; accumulate + bias + ReLU in f32.
    h = jnp.dot(x_ref[...], w1_ref[...],
                preferred_element_type=jnp.float32) + b1_ref[...]
    h = jnp.maximum(h, 0.0)

    h = jnp.dot(h.astype(jnp.bfloat16), w2_ref[...],
                preferred_element_type=jnp.float32) + b2_ref[...]
    h = jnp.maximum(h, 0.0)

    h = jnp.dot(h.astype(jnp.bfloat16), w3_ref[...],
                preferred_element_type=jnp.float32) + b3_ref[...]
    h = jnp.maximum(h, 0.0)

    o_ref[...] = h.astype(o_ref.dtype)


def _pick_batch_tile(B, bytes_per_row):
    """Rows per grid step. ~2 MB streamed per step; >=4 steps for big batches
    (pipelining + v7x 2-TC split); no split for small/latency-bound batches."""
    if B < 8:
        return B                      # full-dim block bypasses the 8-sublane rule
    row_align = 16 if B >= 16 else 8  # 16 = bf16 sublane packing
    target = max(16, (2 * 1024 * 1024) // max(bytes_per_row, 1))
    tile = min(_round_up(B, row_align), _round_up(target, 16))
    if B >= 4 * tile:
        return tile                   # already >=4 steps of ~2 MB each
    if B >= 64 and B * bytes_per_row >= 1024 * 1024:
        # batch big enough that 4 steps cost noise: give the pipeline work
        return max(16, _round_up(pl.cdiv(B, 4), 16))
    return tile                       # small batch: one (or few) steps


def prepare_params(params):
    """One-time weight prep (call OUTSIDE the per-step hot path):
    weights -> bf16 [in_features, out_features], biases -> f32 [1, out]."""
    prep = {}
    for i in (1, 2, 3):
        prep[f"w{i}"] = jnp.asarray(params[f"w{i}"], jnp.bfloat16)
        prep[f"b{i}"] = jnp.asarray(params[f"b{i}"], jnp.float32).reshape(1, -1)
    return prep


@functools.partial(jax.jit, static_argnames=("batch_tile", "out_dtype"))
def action_encoder(action, prepared_params, batch_tile=None, out_dtype=None):
    """action: [B, input_dim]. prepared_params: output of prepare_params()."""
    w1, b1 = prepared_params["w1"], prepared_params["b1"]
    w2, b2 = prepared_params["w2"], prepared_params["b2"]
    w3, b3 = prepared_params["w3"], prepared_params["b3"]

    B, input_dim = action.shape
    hidden_dim = w1.shape[1]
    encode_dim = w3.shape[1]
    out_dtype = action.dtype if out_dtype is None else jnp.dtype(out_dtype)
    out_bytes = jnp.dtype(out_dtype).itemsize

    # Stream x as bf16 (halves the dominant HBM read; fuses upstream under jit).
    x = action.astype(jnp.bfloat16)

    if batch_tile is None:
        batch_tile = _pick_batch_tile(B, input_dim * 2 + encode_dim * out_bytes)
    grid = (pl.cdiv(B, batch_tile),)

    # ---- cost / VMEM hints ----
    mm_flops = input_dim * hidden_dim + hidden_dim * hidden_dim + hidden_dim * encode_dim
    w_bytes = 2 * mm_flops                       # bf16 weights
    b_bytes = 4 * (2 * hidden_dim + encode_dim)  # f32 biases
    cost = pl.CostEstimate(
        flops=2 * B * mm_flops,
        transcendentals=0,
        bytes_accessed=B * input_dim * 2 + B * encode_dim * out_bytes + w_bytes + b_bytes,
    )

    # Double-buffered activation tiles + (conservatively 2x) resident weights.
    act_vmem = 2 * batch_tile * (input_dim * 2 + encode_dim * out_bytes)
    wgt_vmem = 2 * (w_bytes + b_bytes)
    vmem_need = act_vmem + wgt_vmem
    # Leave ~8 MiB headroom under v7x's 64 MiB physical VMEM.
    vmem_limit = int(min(56 * 1024 * 1024, max(2 * vmem_need, 16 * 1024 * 1024)))
    # TODO(synk): K-tiled (reduction-grid) fallback when the resident bf16
    # weights alone exceed the v7x VMEM budget (hidden_dim >~ 3k).

    in_specs = [
        pl.BlockSpec((batch_tile, input_dim), lambda i: (i, 0)),   # x (batch-tiled)
        pl.BlockSpec((input_dim, hidden_dim), lambda i: (0, 0)),   # w1 (resident)
        pl.BlockSpec((1, hidden_dim), lambda i: (0, 0)),           # b1
        pl.BlockSpec((hidden_dim, hidden_dim), lambda i: (0, 0)),  # w2
        pl.BlockSpec((1, hidden_dim), lambda i: (0, 0)),           # b2
        pl.BlockSpec((hidden_dim, encode_dim), lambda i: (0, 0)),  # w3
        pl.BlockSpec((1, encode_dim), lambda i: (0, 0)),           # b3
    ]
    out_spec = pl.BlockSpec((batch_tile, encode_dim), lambda i: (i, 0))

    # Ragged last batch tile: OOB input rows read garbage (harmless, row-wise
    # MLP) and OOB output rows are dropped, so no batch padding or final slice.
    return pl.pallas_call(
        _action_encoder_kernel,
        out_shape=jax.ShapeDtypeStruct((B, encode_dim), out_dtype),
        grid_spec=pltpu.PrefetchScalarGridSpec(
            num_scalar_prefetch=0,
            grid=grid,
            in_specs=in_specs,
            out_specs=out_spec,
        ),
        compiler_params=pltpu.CompilerParams(
            dimension_semantics=("parallel",),
            vmem_limit_bytes=vmem_limit,
        ),
        cost_estimate=cost,
    )(x, w1, b1, w2, b2, w3, b3)


def init_params(key, input_dim, hidden_dim, encode_dim):
    """Deterministic init mimicking nn.Linear default (uniform +/-1/sqrt(fan_in)).
    Weights stored as [in, out] for the kernel's x @ W convention."""
    ks = jax.random.split(key, 6)

    def lin(kw, kb, fan_in, fan_out):
        bound = 1.0 / jnp.sqrt(jnp.float32(fan_in))
        w = jax.random.uniform(kw, (fan_in, fan_out), jnp.float32, -bound, bound)
        b = jax.random.uniform(kb, (fan_out,), jnp.float32, -bound, bound)
        return w, b

    w1, b1 = lin(ks[0], ks[1], input_dim, hidden_dim)
    w2, b2 = lin(ks[2], ks[3], hidden_dim, hidden_dim)
    w3, b3 = lin(ks[4], ks[5], hidden_dim, encode_dim)
    return dict(w1=w1, b1=b1, w2=w2, b2=b2, w3=w3, b3=b3)


def action_encoder_ref(action, params):
    """Reference with the same bf16-operand / f32-accumulate matmul semantics."""
    def layer(x, w, b):
        y = jnp.dot(x.astype(jnp.bfloat16), w.astype(jnp.bfloat16),
                    preferred_element_type=jnp.float32) + b.reshape(1, -1)
        return jnp.maximum(y, 0.0)

    h = layer(action, params["w1"], params["b1"])
    h = layer(h, params["w2"], params["b2"])
    return layer(h, params["w3"], params["b3"])


if __name__ == "__main__":
    key = jax.random.PRNGKey(0)
    k_x, k_p = jax.random.split(key)

    batch, input_dim, hidden_dim, encode_dim = 8, 4, 32, 16
    action = jax.random.normal(k_x, (batch, input_dim), jnp.float32)
    params = init_params(k_p, input_dim, hidden_dim, encode_dim)

    prepared = prepare_params(params)            # one-time weight cast / layout
    out = action_encoder(action, prepared)
    out = jax.block_until_ready(out)

    ref = action_encoder_ref(action, params)
    assert out.shape == (batch, encode_dim)
    assert jnp.allclose(out, ref, atol=2e-3, rtol=2e-3), "mismatch vs reference"

    print("KERNEL_OK")
</pallas_src>

<mosaic_0001>
module attributes {stable_mosaic.version = 11 : i64} {
  func.func @_action_encoder_kernel(%arg0: i32, %arg1: memref<8x4xbf16, #tpu.memory_space<vmem>>, %arg2: memref<4x32xbf16, #tpu.memory_space<vmem>>, %arg3: memref<1x32xf32, #tpu.memory_space<vmem>>, %arg4: memref<32x32xbf16, #tpu.memory_space<vmem>>, %arg5: memref<1x32xf32, #tpu.memory_space<vmem>>, %arg6: memref<32x16xbf16, #tpu.memory_space<vmem>>, %arg7: memref<1x16xf32, #tpu.memory_space<vmem>>, %arg8: memref<8x16xf32, #tpu.memory_space<vmem>>) attributes {dimension_semantics = [#tpu.dimension_semantics<parallel>], iteration_bounds = array<i64: 1>, scalar_prefetch = 0 : i64, scratch_operands = 0 : i64, tpu.core_type = #tpu.core_type<tc>, window_params = [{transform_indices = @transform_0, window_bounds = array<i64: 8, 4>}, {pipeline_mode = #tpu.pipeline_mode<synchronous>, transform_indices = @transform_1, window_bounds = array<i64: 4, 32>}, {pipeline_mode = #tpu.pipeline_mode<synchronous>, transform_indices = @transform_2, window_bounds = array<i64: 1, 32>}, {pipeline_mode = #tpu.pipeline_mode<synchronous>, transform_indices = @transform_3, window_bounds = array<i64: 32, 32>}, {pipeline_mode = #tpu.pipeline_mode<synchronous>, transform_indices = @transform_4, window_bounds = array<i64: 1, 32>}, {pipeline_mode = #tpu.pipeline_mode<synchronous>, transform_indices = @transform_5, window_bounds = array<i64: 32, 16>}, {pipeline_mode = #tpu.pipeline_mode<synchronous>, transform_indices = @transform_6, window_bounds = array<i64: 1, 16>}, {transform_indices = @transform_7, window_bounds = array<i64: 8, 16>}]} {
    %c0 = arith.constant 0 : index
    %c0_0 = arith.constant 0 : index
    %0 = vector.load %arg1[%c0, %c0_0] : memref<8x4xbf16, #tpu.memory_space<vmem>>, vector<8x4xbf16>
    %c0_1 = arith.constant 0 : index
    %c0_2 = arith.constant 0 : index
    %1 = vector.load %arg2[%c0_1, %c0_2] : memref<4x32xbf16, #tpu.memory_space<vmem>>, vector<4x32xbf16>
    %cst = arith.constant dense<0.000000e+00> : vector<8x32xf32>
    %2 = tpu.matmul %0, %1, %cst {dimension_numbers = #tpu.dot_dimension_numbers<[1], [0], [0], [1], [0, 0, 1, 1], [], []>} : vector<8x4xbf16>, vector<4x32xbf16>, vector<8x32xf32> -> vector<8x32xf32>
    %c0_3 = arith.constant 0 : index
    %c0_4 = arith.constant 0 : index
    %3 = vector.load %arg3[%c0_3, %c0_4] : memref<1x32xf32, #tpu.memory_space<vmem>>, vector<1x32xf32>
    %4 = vector.broadcast %3 : vector<1x32xf32> to vector<8x32xf32>
    %5 = arith.addf %2, %4 : vector<8x32xf32>
    %cst_5 = arith.constant 0.000000e+00 : f32
    %6 = vector.broadcast %cst_5 : f32 to vector<8x32xf32>
    %7 = arith.maximumf %5, %6 : vector<8x32xf32>
    %8 = arith.truncf %7 : vector<8x32xf32> to vector<8x32xbf16>
    %c0_6 = arith.constant 0 : index
    %c0_7 = arith.constant 0 : index
    %9 = vector.load %arg4[%c0_6, %c0_7] : memref<32x32xbf16, #tpu.memory_space<vmem>>, vector<32x32xbf16>
    %cst_8 = arith.constant dense<0.000000e+00> : vector<8x32xf32>
    %10 = tpu.matmul %8, %9, %cst_8 {dimension_numbers = #tpu.dot_dimension_numbers<[1], [0], [0], [1], [0, 0, 1, 1], [], []>} : vector<8x32xbf16>, vector<32x32xbf16>, vector<8x32xf32> -> vector<8x32xf32>
    %c0_9 = arith.constant 0 : index
    %c0_10 = arith.constant 0 : index
    %11 = vector.load %arg5[%c0_9, %c0_10] : memref<1x32xf32, #tpu.memory_space<vmem>>, vector<1x32xf32>
    %12 = vector.broadcast %11 : vector<1x32xf32> to vector<8x32xf32>
    %13 = arith.addf %10, %12 : vector<8x32xf32>
    %cst_11 = arith.constant 0.000000e+00 : f32
    %14 = vector.broadcast %cst_11 : f32 to vector<8x32xf32>
    %15 = arith.maximumf %13, %14 : vector<8x32xf32>
    %16 = arith.truncf %15 : vector<8x32xf32> to vector<8x32xbf16>
    %c0_12 = arith.constant 0 : index
    %c0_13 = arith.constant 0 : index
    %17 = vector.load %arg6[%c0_12, %c0_13] : memref<32x16xbf16, #tpu.memory_space<vmem>>, vector<32x16xbf16>
    %cst_14 = arith.constant dense<0.000000e+00> : vector<8x16xf32>
    %18 = tpu.matmul %16, %17, %cst_14 {dimension_numbers = #tpu.dot_dimension_numbers<[1], [0], [0], [1], [0, 0, 1, 1], [], []>} : vector<8x32xbf16>, vector<32x16xbf16>, vector<8x16xf32> -> vector<8x16xf32>
    %c0_15 = arith.constant 0 : index
    %c0_16 = arith.constant 0 : index
    %19 = vector.load %arg7[%c0_15, %c0_16] : memref<1x16xf32, #tpu.memory_space<vmem>>, vector<1x16xf32>
    %20 = vector.broadcast %19 : vector<1x16xf32> to vector<8x16xf32>
    %21 = arith.addf %18, %20 : vector<8x16xf32>
    %cst_17 = arith.constant 0.000000e+00 : f32
    %22 = vector.broadcast %cst_17 : f32 to vector<8x16xf32>
    %23 = arith.maximumf %21, %22 : vector<8x16xf32>
    %c0_18 = arith.constant 0 : index
    %c0_19 = arith.constant 0 : index
    %24 = vector.load %arg8[%c0_18, %c0_19] : memref<8x16xf32, #tpu.memory_space<vmem>>, vector<8x16xf32>
    tpu.vector_store %arg8[%c0_18, %c0_19], %23 {strides = array<i32>} : memref<8x16xf32, #tpu.memory_space<vmem>>, vector<8x16xf32>,
    return
  }
  func.func @transform_0(%arg0: i32) -> (i32, i32) {
    %c0_i32 = arith.constant 0 : i32
    %c0_i32_0 = arith.constant 0 : i32
    return %arg0, %c0_i32 : i32, i32
  }
  func.func @transform_1(%arg0: i32) -> (i32, i32) {
    %c0_i32 = arith.constant 0 : i32
    %c0_i32_0 = arith.constant 0 : i32
    %c0_i32_1 = arith.constant 0 : i32
    return %c0_i32, %c0_i32_0 : i32, i32
  }
  func.func @transform_2(%arg0: i32) -> (i32, i32) {
    %c0_i32 = arith.constant 0 : i32
    %c0_i32_0 = arith.constant 0 : i32
    %c0_i32_1 = arith.constant 0 : i32
    return %c0_i32, %c0_i32_0 : i32, i32
  }
  func.func @transform_3(%arg0: i32) -> (i32, i32) {
    %c0_i32 = arith.constant 0 : i32
    %c0_i32_0 = arith.constant 0 : i32
    %c0_i32_1 = arith.constant 0 : i32
    return %c0_i32, %c0_i32_0 : i32, i32
  }
  func.func @transform_4(%arg0: i32) -> (i32, i32) {
    %c0_i32 = arith.constant 0 : i32
    %c0_i32_0 = arith.constant 0 : i32
    %c0_i32_1 = arith.constant 0 : i32
    return %c0_i32, %c0_i32_0 : i32, i32
  }
  func.func @transform_5(%arg0: i32) -> (i32, i32) {
    %c0_i32 = arith.constant 0 : i32
    %c0_i32_0 = arith.constant 0 : i32
    %c0_i32_1 = arith.constant 0 : i32
    return %c0_i32, %c0_i32_0 : i32, i32
  }
  func.func @transform_6(%arg0: i32) -> (i32, i32) {
    %c0_i32 = arith.constant 0 : i32
    %c0_i32_0 = arith.constant 0 : i32
    %c0_i32_1 = arith.constant 0 : i32
    return %c0_i32, %c0_i32_0 : i32, i32
  }
  func.func @transform_7(%arg0: i32) -> (i32, i32) {
    %c0_i32 = arith.constant 0 : i32
    %c0_i32_0 = arith.constant 0 : i32
    return %arg0, %c0_i32 : i32, i32
  }
}

</mosaic_0001>

<llo_original>
// kernel: action_encoder.1
$region0: #{action_encoder.1}
  #allocation0 [shape = 'u32[]', space=smem, size = 0x4, offset = 0x4, fixed_abs, tag = 'smem constant byte address 0x4 - core index']
  #allocation1 [shape = 'u32[72,128]{1,0:T(1,128)}', space=vmem, size = 0x9000, scoped, tag = 'internal scratch']
  %s0 = inlined_call_operand.vmem [shape: bf16[8,4], index: 0, kind: input, shape index: {}]
  %s1 = inlined_call_operand.vmem [shape: bf16[4,32], index: 1, kind: input, shape index: {}]
  %s2 = inlined_call_operand.vmem [shape: f32[1,32], index: 2, kind: input, shape index: {}]
  %s3 = inlined_call_operand.vmem [shape: bf16[32,32], index: 3, kind: input, shape index: {}]
  %s4 = inlined_call_operand.vmem [shape: f32[1,32], index: 4, kind: input, shape index: {}]
  %s5 = inlined_call_operand.vmem [shape: bf16[32,16], index: 5, kind: input, shape index: {}]
  %s6 = inlined_call_operand.vmem [shape: f32[1,16], index: 6, kind: input, shape index: {}]
  %s7 = inlined_call_operand.hbm [shape: f32[8,16], index: 7, kind: output, shape index: {}]
  %s8 = sld [smem:[#allocation0]]
  $region38: #{action_encoder.1} parent=0
    _
  %s10 = ssub.s32 1, %s8
  %s11 = scalar_select 0, %s10, %s8
  $region1: #{action_encoder.1} parent=0
    #allocation2 [shape = 'u8[4096]{0}', space=vmem, size = 0x1000, scoped, tag = 'output window, operand 0, single buffered']
    #allocation3 [shape = 's32[1]{0}', space=sflag, size = 0x4, scoped, tag = 'scoped memory for action_encoder.1']
    %12 = vsyncpa [#allocation3], 0
    // Predicated region
    $region2: #{action_encoder.1} parent=1 // pred_check
      _
    $region3: #{action_encoder.1} parent=1 // pred_check_branch
      %14 = sbr.rel (0) target = $region5
    $region4: #{action_encoder.1} parent=1 // pred_region
      _
    $region5: #{action_encoder.1} parent=1 // pred_fallthru
      _
    // Predicated region
    $region6: #{action_encoder.1} parent=1 // pred_check
      _
    $region7: #{action_encoder.1} parent=1 // pred_check_branch
      %16 = sbr.rel (0) target = $region9
    $region8: #{action_encoder.1} parent=1 // pred_region
      _
    $region9: #{action_encoder.1} parent=1 // pred_fallthru
      _
    // Predicated region
    $region10: #{action_encoder.1} parent=1 // pred_check
      _
    $region11: #{action_encoder.1} parent=1 // pred_check_branch
      %18 = sbr.rel (0) target = $region13
    $region12: #{action_encoder.1} parent=1 // pred_region
      _
    $region13: #{action_encoder.1} parent=1 // pred_fallthru
      _
    // Predicated region
    $region14: #{action_encoder.1} parent=1 // pred_check
      _
    $region15: #{action_encoder.1} parent=1 // pred_check_branch
      %20 = sbr.rel (0) target = $region17
    $region16: #{action_encoder.1} parent=1 // pred_region
      _
    $region17: #{action_encoder.1} parent=1 // pred_fallthru
      _
    // Predicated region
    $region18: #{action_encoder.1} parent=1 // pred_check
      _
    $region19: #{action_encoder.1} parent=1 // pred_check_branch
      %22 = sbr.rel (0) target = $region21
    $region20: #{action_encoder.1} parent=1 // pred_region
      _
    $region21: #{action_encoder.1} parent=1 // pred_fallthru
      _
    // Predicated region
    $region22: #{action_encoder.1} parent=1 // pred_check
      _
    $region23: #{action_encoder.1} parent=1 // pred_check_branch
      %24 = sbr.rel (0) target = $region25
    $region24: #{action_encoder.1} parent=1 // pred_region
      _
    $region25: #{action_encoder.1} parent=1 // pred_fallthru
      _
    // Predicated region
    $region26: #{action_encoder.1} parent=1 // pred_check
      _
    $region27: #{action_encoder.1} parent=1 // pred_check_branch
      %26 = sbr.rel (0) target = $region29
    $region28: #{action_encoder.1} parent=1 // pred_region
      _
    $region29: #{action_encoder.1} parent=1 // pred_fallthru
      _
    %v28 = vld [vmem:[%s0] sm:$0xf]
    %v29 = vld [vmem:[%s1] sm:$0x3]
    %v30 = vld [vmem:[%s2] sm:$0x1]
    %v32 = vperm.slane %v30, 0
    %vm34 = vcmask 31744
    %v36 = vsel %vm34, %v28, 0
    %vm38 = vcmask 1041408
    %v40 = vsel %vm38, %v29, 0
    %42 = vmatpush.bf16.msra.mxu0 0
    %43 = vmatpush.bf16.msra.mxu0 0
    %44 = vmatpush.bf16.msra.mxu0 0
    %45 = vmatpush.bf16.msra.mxu0 0
    %46 = vmatpush.bf16.msra.mxu0 0
    %47 = vmatpush.bf16.msra.mxu0 0
    %48 = vmatpush.bf16.msra.mxu0 0
    %49 = vmatpush.bf16.msra.mxu0 %v40
    %50 = vmatmul.bf16.gmra.mxu0 %v36
    %v51 = vpop.f32.mrf.mxu0
    %v52 = vadd.f32 %v32, %v51
    %v53 = vpop.f32.mrf.mxu0
    %54 = vdwg.mxu0
    %v55 = vmax.f32 %v52, 0.0
    %v56 = vpack.c.bf16 %v55, %v55
    %v57 = vld [vmem:[%s3] sm:$0xf]
    %v58 = vld [vmem:[%s3 + $0x4] sm:$0xf]
    %v59 = vld [vmem:[%s3 + $0x8] sm:$0xf]
    %v60 = vld [vmem:[%s3 + $0xc] sm:$0xf]
    %v61 = vld [vmem:[%s4] sm:$0x1]
    %v63 = vperm.slane %v61, 0
    %v69 = vunpack.c.l.b16 %v57
    %v70 = vunpack.c.l.b16 %v58
    %v71 = vunpack.c.l.b16 %v59
    %v72 = vunpack.c.l.b16 %v60
    %v73 = vpack.c.b16 %v70, %v69
    %v74 = vpack.c.b16 %v72, %v71
    %vm77 = vcmask 261120
    %v79 = vsel %vm77, %v56, 0
    %81 = vmatpush.bf16.msra.mxu0 0
    %82 = vmatpush.bf16.msra.mxu0 0
    %83 = vmatpush.bf16.msra.mxu0 0
    %84 = vmatpush.bf16.msra.mxu0 0
    %85 = vmatpush.bf16.msra.mxu0 0
    %86 = vmatpush.bf16.msra.mxu0 0
    %87 = vmatpush.bf16.msra.mxu0 %v74
    %88 = vmatpush.bf16.msra.mxu0 %v73
    %89 = vmatmul.bf16.gmra.mxu0 %v79
    %v90 = vpop.f32.mrf.mxu0
    %v91 = vadd.f32 %v63, %v90
    %v92 = vpop.f32.mrf.mxu0
    %93 = vdwg.mxu0
    %v94 = vmax.f32 %v91, 0.0
    %v95 = vpack.c.bf16 %v94, %v94
    %v96 = vld [vmem:[%s5] sm:$0xf]
    %v97 = vld [vmem:[%s5 + $0x4] sm:$0xf]
    %v98 = vld [vmem:[%s5 + $0x8] sm:$0xf]
    %v99 = vld [vmem:[%s5 + $0xc] sm:$0xf]
    %v100 = vld [vmem:[%s6] sm:$0x1]
    %v102 = vperm.slane %v100, 0
    %v108 = vunpack.c.l.b16 %v96
    %v109 = vunpack.c.l.b16 %v97
    %v110 = vunpack.c.l.b16 %v98
    %v111 = vunpack.c.l.b16 %v99
    %v112 = vpack.c.b16 %v109, %v108
    %v113 = vpack.c.b16 %v111, %v110
    %v117 = vsel %vm77, %v95, 0
    %119 = vmatpush.bf16.msra.mxu0 0
    %120 = vmatpush.bf16.msra.mxu0 0
    %121 = vmatpush.bf16.msra.mxu0 0
    %122 = vmatpush.bf16.msra.mxu0 0
    %123 = vmatpush.bf16.msra.mxu0 0
    %124 = vmatpush.bf16.msra.mxu0 0
    %125 = vmatpush.bf16.msra.mxu0 %v113
    %126 = vmatpush.bf16.msra.mxu0 %v112
    %127 = vmatmul.bf16.gmra.mxu0 %v117
    %v128 = vpop.f32.mrf.mxu0
    %v129 = vadd.f32 %v102, %v128
    %v130 = vpop.f32.mrf.mxu0
    %131 = vdwg.mxu0
    %v132 = vmax.f32 %v129, 0.0
    %vm133 = vcmask 130048
    %134 = vst.msk [vmem:[#allocation2] sm:$0xff] %vm133, %v132
    // Predicated region
    $region30: #{action_encoder.1} parent=1 // pred_check
      _
    $region31: #{action_encoder.1} parent=1 // pred_check_branch
      %136 = sbr.rel (0) target = $region33
    $region32: #{action_encoder.1} parent=1 // pred_region
      %138 = vsyncadd [#allocation3], 0
      %s140 = sshll.u32 [#allocation2], 4
      %s141 = int_to_ptr.vmem [resolvable:$true] %s140
      %s142 = sshll.u32 %s7, 4
      %s143 = int_to_ptr.hbm [resolvable:$true] %s142
      %145 = dma.vmem_to_hbm [thread:$0]  %s141, 128, %s143, [#allocation3]
    $region33: #{action_encoder.1} parent=1 // pred_fallthru
      _
    // Predicated region
    $region34: #{action_encoder.1} parent=1 // pred_check
      _
    $region35: #{action_encoder.1} parent=1 // pred_check_branch
      %147 = sbr.rel (0) target = $region37
    $region36: #{action_encoder.1} parent=1 // pred_region
      %149 = dma.done [#allocation3], 128
    $region37: #{action_encoder.1} parent=1 // pred_fallthru
      _
    %150 = vsyncpa [#allocation3], 1

</llo_original>
